<compile_context>
chip_gen: v5e
topology: v5e:2x2
jax: 0.10.0
libtpu: 0.0.40
codegen_flags: <defaults>
</compile_context>

<pallas_src>
import jax
import jax.numpy as jnp
from jax.experimental import pallas as pl
from jax.experimental.pallas import tpu as pltpu

BN_EPS = 1e-5
LANE = 128
SUBLANE = 8


def _round_up(x, m):
    return ((x + m - 1) // m) * m


# ----------------------------------------------------------------------------
# Pallas kernel: grid point (batch_tile i, residual_block k).
# ----------------------------------------------------------------------------
def _resnet_kernel(x_ref,       # (TB, F_pad)        f32
                   win_ref,     # (F_pad, H_pad)     bf16  (BN folded)
                   bin_ref,     # (1, H_pad)         f32
                   w1_ref,      # (H_pad, H_pad)     bf16  (block k, BN folded)
                   b1_ref,      # (1, H_pad)         f32
                   w2_ref,      # (H_pad, H_pad)     bf16  (block k, BN folded)
                   b2_ref,      # (1, H_pad)         f32
                   wout_ref,    # (H_pad, C_pad)     bf16
                   bout_ref,    # (1, C_pad)         f32
                   out_ref,     # (TB, C_pad)        f32
                   h_ref):      # VMEM scratch (TB, H_pad) f32 — carries h across k
    k = pl.program_id(1)

    # Input layer + folded BN + ReLU (only at the first residual-block step).
    @pl.when(k == 0)
    def _():
        h = jnp.dot(x_ref[...].astype(jnp.bfloat16), win_ref[...],
                    preferred_element_type=jnp.float32) + bin_ref[...]
        h_ref[...] = jnp.maximum(h, 0.0)

    # Residual block k.
    identity = h_ref[...]
    t = jnp.dot(identity.astype(jnp.bfloat16), w1_ref[...],
                preferred_element_type=jnp.float32) + b1_ref[...]
    t = jnp.maximum(t, 0.0)                      # ReLU (dropout = identity)
    t = jnp.dot(t.astype(jnp.bfloat16), w2_ref[...],
                preferred_element_type=jnp.float32) + b2_ref[...]
    h_ref[...] = jnp.maximum(t + identity, 0.0)

    # Output layer (only at the last residual-block step).
    @pl.when(k == pl.num_programs(1) - 1)
    def _():
        logits = jnp.dot(h_ref[...].astype(jnp.bfloat16), wout_ref[...],
                         preferred_element_type=jnp.float32) + bout_ref[...]
        out_ref[...] = logits.astype(out_ref.dtype)


# ----------------------------------------------------------------------------
# Parameter construction (PyTorch-style init, BN folded, lane-padded, bf16)
# ----------------------------------------------------------------------------
def _linear_params(key, in_dim, out_dim):
    """nn.Linear init: U(-1/sqrt(in), 1/sqrt(in)); weight stored (out, in)."""
    kw, kb = jax.random.split(key)
    bound = 1.0 / jnp.sqrt(jnp.float32(in_dim))
    w = jax.random.uniform(kw, (out_dim, in_dim), jnp.float32, -bound, bound)
    b = jax.random.uniform(kb, (out_dim,), jnp.float32, -bound, bound)
    return w, b


def _fold_bn(w, b):
    """Fold eval-mode BN (mean=0, var=1, gamma=1, beta=0, eps) into a Linear.
    Returns weight transposed to (in, out) and bias (out,)."""
    scale = 1.0 / jnp.sqrt(1.0 + BN_EPS)
    return (w * scale).T, b * scale


def _pad2(w, rows, cols):
    r, c = w.shape
    return jnp.pad(w, ((0, rows - r), (0, cols - c)))


def init_params(key, input_dim, hidden_dim, num_blocks, num_classes,
                weight_dtype=jnp.bfloat16):
    f_pad = _round_up(input_dim, LANE)
    h_pad = _round_up(hidden_dim, LANE)
    c_pad = _round_up(num_classes, LANE)

    keys = jax.random.split(key, 2 + 2 * num_blocks)

    w_in, b_in = _fold_bn(*_linear_params(keys[0], input_dim, hidden_dim))
    w_in = _pad2(w_in, f_pad, h_pad).astype(weight_dtype)
    b_in = jnp.pad(b_in, (0, h_pad - hidden_dim)).reshape(1, h_pad)

    w1s, b1s, w2s, b2s = [], [], [], []
    for i in range(num_blocks):
        w1, b1 = _fold_bn(*_linear_params(keys[1 + 2 * i], hidden_dim, hidden_dim))
        w2, b2 = _fold_bn(*_linear_params(keys[2 + 2 * i], hidden_dim, hidden_dim))
        w1s.append(_pad2(w1, h_pad, h_pad).astype(weight_dtype))
        w2s.append(_pad2(w2, h_pad, h_pad).astype(weight_dtype))
        b1s.append(jnp.pad(b1, (0, h_pad - hidden_dim)).reshape(1, h_pad))
        b2s.append(jnp.pad(b2, (0, h_pad - hidden_dim)).reshape(1, h_pad))

    w_out, b_out = _linear_params(keys[-1], hidden_dim, num_classes)
    w_out = _pad2(w_out.T, h_pad, c_pad).astype(weight_dtype)
    b_out = jnp.pad(b_out, (0, c_pad - num_classes)).reshape(1, c_pad)

    return dict(
        w_in=w_in, b_in=b_in,
        w1=jnp.stack(w1s), b1=jnp.stack(b1s),        # (NB, H, H), (NB, 1, H)
        w2=jnp.stack(w2s), b2=jnp.stack(b2s),
        w_out=w_out, b_out=b_out,
    )


# ----------------------------------------------------------------------------
# Wrapper
# ----------------------------------------------------------------------------
def tabular_resnet_forward(x, params, num_blocks, num_classes, *, batch_tile=512):
    assert num_blocks >= 1
    B, F = x.shape
    F_pad, H_pad = params["w_in"].shape
    C_pad = params["w_out"].shape[1]
    NB = num_blocks

    # Real batch tile: multiple of 8 sublanes; pad B so remainder rows are kept.
    TB = min(batch_tile, _round_up(B, SUBLANE))
    B_pad = _round_up(B, TB)
    n_batch_tiles = B_pad // TB

    x_p = jnp.pad(x.astype(jnp.float32), ((0, B_pad - B), (0, F_pad - F)))

    flops = 2 * B_pad * (F_pad * H_pad + NB * 2 * H_pad * H_pad + H_pad * C_pad)
    weight_bytes = sum(int(v.size) * v.dtype.itemsize for v in params.values())
    bytes_accessed = (int(x_p.size) * 4 + B_pad * C_pad * 4
                      + weight_bytes * n_batch_tiles)

    out = pl.pallas_call(
        _resnet_kernel,
        out_shape=jax.ShapeDtypeStruct((B_pad, C_pad), jnp.float32),
        grid_spec=pltpu.PrefetchScalarGridSpec(
            num_scalar_prefetch=0,
            grid=(n_batch_tiles, NB),
            in_specs=[
                pl.BlockSpec((TB, F_pad), lambda i, k: (i, 0)),             # x
                pl.BlockSpec((F_pad, H_pad), lambda i, k: (0, 0)),          # w_in
                pl.BlockSpec((1, H_pad), lambda i, k: (0, 0)),              # b_in
                pl.BlockSpec((None, H_pad, H_pad), lambda i, k: (k, 0, 0)), # w1[k]
                pl.BlockSpec((None, 1, H_pad), lambda i, k: (k, 0, 0)),     # b1[k]
                pl.BlockSpec((None, H_pad, H_pad), lambda i, k: (k, 0, 0)), # w2[k]
                pl.BlockSpec((None, 1, H_pad), lambda i, k: (k, 0, 0)),     # b2[k]
                pl.BlockSpec((H_pad, C_pad), lambda i, k: (0, 0)),          # w_out
                pl.BlockSpec((1, C_pad), lambda i, k: (0, 0)),              # b_out
            ],
            out_specs=pl.BlockSpec((TB, C_pad), lambda i, k: (i, 0)),
            scratch_shapes=[pltpu.VMEM((TB, H_pad), jnp.float32)],
        ),
        compiler_params=pltpu.CompilerParams(
            dimension_semantics=("parallel", "arbitrary"),
            vmem_limit_bytes=48 * 1024 * 1024,
        ),
        cost_estimate=pl.CostEstimate(flops=flops, transcendentals=0,
                                      bytes_accessed=bytes_accessed),
    )(x_p, params["w_in"], params["b_in"],
      params["w1"], params["b1"], params["w2"], params["b2"],
      params["w_out"], params["b_out"])

    return out[:B, :num_classes]


# Pure-JAX reference (same folded/padded bf16 params, same cast points).
def reference_forward(x, params, num_blocks, num_classes):
    F_pad = params["w_in"].shape[0]
    x_p = jnp.pad(x.astype(jnp.float32), ((0, 0), (0, F_pad - x.shape[1])))
    h = jnp.dot(x_p.astype(jnp.bfloat16), params["w_in"],
                preferred_element_type=jnp.float32) + params["b_in"]
    h = jnp.maximum(h, 0.0)
    for blk in range(num_blocks):
        identity = h
        t = jnp.dot(h.astype(jnp.bfloat16), params["w1"][blk],
                    preferred_element_type=jnp.float32) + params["b1"][blk]
        t = jnp.maximum(t, 0.0)
        t = jnp.dot(t.astype(jnp.bfloat16), params["w2"][blk],
                    preferred_element_type=jnp.float32) + params["b2"][blk]
        h = jnp.maximum(t + identity, 0.0)
    logits = jnp.dot(h.astype(jnp.bfloat16), params["w_out"],
                     preferred_element_type=jnp.float32) + params["b_out"]
    return logits[:, :num_classes]


if __name__ == "__main__":
    # Small, module-consistent shapes: tabular input [batch, input_dim].
    batch, input_dim, hidden_dim, num_blocks, num_classes = 8, 16, 32, 2, 3
    dropout = 0.1  # identity at inference

    key = jax.random.PRNGKey(0)
    kx, kp = jax.random.split(key)
    x = jax.random.normal(kx, (batch, input_dim), jnp.float32)
    params = init_params(kp, input_dim, hidden_dim, num_blocks, num_classes)

    logits = tabular_resnet_forward(x, params, num_blocks, num_classes)
    logits = jax.block_until_ready(logits)

    ref = reference_forward(x, params, num_blocks, num_classes)
    assert logits.shape == (batch, num_classes)
    assert jnp.allclose(logits, ref, atol=1e-2, rtol=1e-2), "mismatch vs reference"

    print("KERNEL_OK")
</pallas_src>

<mosaic_0001>
module attributes {stable_mosaic.version = 11 : i64} {
  func.func @_resnet_kernel(%arg0: i32, %arg1: i32, %arg2: memref<8x128xf32, #tpu.memory_space<vmem>>, %arg3: memref<128x128xbf16, #tpu.memory_space<vmem>>, %arg4: memref<1x128xf32, #tpu.memory_space<vmem>>, %arg5: memref<1x128x128xbf16, #tpu.memory_space<vmem>>, %arg6: memref<1x1x128xf32, #tpu.memory_space<vmem>>, %arg7: memref<1x128x128xbf16, #tpu.memory_space<vmem>>, %arg8: memref<1x1x128xf32, #tpu.memory_space<vmem>>, %arg9: memref<128x128xbf16, #tpu.memory_space<vmem>>, %arg10: memref<1x128xf32, #tpu.memory_space<vmem>>, %arg11: memref<8x128xf32, #tpu.memory_space<vmem>>, %arg12: memref<8x128xf32, #tpu.memory_space<vmem>>) attributes {dimension_semantics = [#tpu.dimension_semantics<parallel>, #tpu.dimension_semantics<arbitrary>], iteration_bounds = array<i64: 1, 2>, scalar_prefetch = 0 : i64, scratch_operands = 1 : i64, tpu.core_type = #tpu.core_type<tc>, window_params = [{transform_indices = @transform_0, window_bounds = array<i64: 8, 128>}, {pipeline_mode = #tpu.pipeline_mode<synchronous>, transform_indices = @transform_1, window_bounds = array<i64: 128, 128>}, {pipeline_mode = #tpu.pipeline_mode<synchronous>, transform_indices = @transform_2, window_bounds = array<i64: 1, 128>}, {transform_indices = @transform_3, window_bounds = array<i64: 1, 128, 128>}, {transform_indices = @transform_4, window_bounds = array<i64: 1, 1, 128>}, {transform_indices = @transform_5, window_bounds = array<i64: 1, 128, 128>}, {transform_indices = @transform_6, window_bounds = array<i64: 1, 1, 128>}, {pipeline_mode = #tpu.pipeline_mode<synchronous>, transform_indices = @transform_7, window_bounds = array<i64: 128, 128>}, {pipeline_mode = #tpu.pipeline_mode<synchronous>, transform_indices = @transform_8, window_bounds = array<i64: 1, 128>}, {transform_indices = @transform_9, window_bounds = array<i64: 8, 128>}]} {
    %c0_i32 = arith.constant 0 : i32
    %0 = arith.cmpi eq, %arg1, %c0_i32 : i32
    %1 = arith.extui %0 : i1 to i32
    %c0_i32_0 = arith.constant 0 : i32
    %2 = arith.cmpi ne, %1, %c0_i32_0 : i32
    scf.if %2 {
      %c0_20 = arith.constant 0 : index
      %c0_21 = arith.constant 0 : index
      %29 = vector.load %arg2[%c0_20, %c0_21] : memref<8x128xf32, #tpu.memory_space<vmem>>, vector<8x128xf32>
      %30 = arith.truncf %29 : vector<8x128xf32> to vector<8x128xbf16>
      %c0_22 = arith.constant 0 : index
      %c0_23 = arith.constant 0 : index
      %31 = vector.load %arg3[%c0_22, %c0_23] : memref<128x128xbf16, #tpu.memory_space<vmem>>, vector<128x128xbf16>
      %cst_24 = arith.constant dense<0.000000e+00> : vector<8x128xf32>
      %32 = tpu.matmul %30, %31, %cst_24 {dimension_numbers = #tpu.dot_dimension_numbers<[1], [0], [0], [1], [0, 0, 1, 1], [], []>} : vector<8x128xbf16>, vector<128x128xbf16>, vector<8x128xf32> -> vector<8x128xf32>
      %c0_25 = arith.constant 0 : index
      %c0_26 = arith.constant 0 : index
      %33 = vector.load %arg4[%c0_25, %c0_26] : memref<1x128xf32, #tpu.memory_space<vmem>>, vector<1x128xf32>
      %34 = vector.broadcast %33 : vector<1x128xf32> to vector<8x128xf32>
      %35 = arith.addf %32, %34 : vector<8x128xf32>
      %cst_27 = arith.constant 0.000000e+00 : f32
      %36 = vector.broadcast %cst_27 : f32 to vector<8x128xf32>
      %37 = arith.maximumf %35, %36 : vector<8x128xf32>
      %c0_28 = arith.constant 0 : index
      %c0_29 = arith.constant 0 : index
      %38 = vector.load %arg12[%c0_28, %c0_29] : memref<8x128xf32, #tpu.memory_space<vmem>>, vector<8x128xf32>
      tpu.vector_store %arg12[%c0_28, %c0_29], %37 {strides = array<i32>} : memref<8x128xf32, #tpu.memory_space<vmem>>, vector<8x128xf32>,
    } else {
    }
    %c0 = arith.constant 0 : index
    %c0_1 = arith.constant 0 : index
    %3 = vector.load %arg12[%c0, %c0_1] : memref<8x128xf32, #tpu.memory_space<vmem>>, vector<8x128xf32>
    %4 = arith.truncf %3 : vector<8x128xf32> to vector<8x128xbf16>
    %c0_2 = arith.constant 0 : index
    %c0_3 = arith.constant 0 : index
    %c0_4 = arith.constant 0 : index
    %5 = vector.load %arg5[%c0_2, %c0_3, %c0_4] : memref<1x128x128xbf16, #tpu.memory_space<vmem>>, vector<1x128x128xbf16>
    %6 = vector.shape_cast %5 : vector<1x128x128xbf16> to vector<128x128xbf16>
    %cst = arith.constant dense<0.000000e+00> : vector<8x128xf32>
    %7 = tpu.matmul %4, %6, %cst {dimension_numbers = #tpu.dot_dimension_numbers<[1], [0], [0], [1], [0, 0, 1, 1], [], []>} : vector<8x128xbf16>, vector<128x128xbf16>, vector<8x128xf32> -> vector<8x128xf32>
    %c0_5 = arith.constant 0 : index
    %c0_6 = arith.constant 0 : index
    %c0_7 = arith.constant 0 : index
    %8 = vector.load %arg6[%c0_5, %c0_6, %c0_7] : memref<1x1x128xf32, #tpu.memory_space<vmem>>, vector<1x1x128xf32>
    %9 = vector.shape_cast %8 : vector<1x1x128xf32> to vector<1x128xf32>
    %10 = vector.broadcast %9 : vector<1x128xf32> to vector<8x128xf32>
    %11 = arith.addf %7, %10 : vector<8x128xf32>
    %cst_8 = arith.constant 0.000000e+00 : f32
    %12 = vector.broadcast %cst_8 : f32 to vector<8x128xf32>
    %13 = arith.maximumf %11, %12 : vector<8x128xf32>
    %14 = arith.truncf %13 : vector<8x128xf32> to vector<8x128xbf16>
    %c0_9 = arith.constant 0 : index
    %c0_10 = arith.constant 0 : index
    %c0_11 = arith.constant 0 : index
    %15 = vector.load %arg7[%c0_9, %c0_10, %c0_11] : memref<1x128x128xbf16, #tpu.memory_space<vmem>>, vector<1x128x128xbf16>
    %16 = vector.shape_cast %15 : vector<1x128x128xbf16> to vector<128x128xbf16>
    %cst_12 = arith.constant dense<0.000000e+00> : vector<8x128xf32>
    %17 = tpu.matmul %14, %16, %cst_12 {dimension_numbers = #tpu.dot_dimension_numbers<[1], [0], [0], [1], [0, 0, 1, 1], [], []>} : vector<8x128xbf16>, vector<128x128xbf16>, vector<8x128xf32> -> vector<8x128xf32>
    %c0_13 = arith.constant 0 : index
    %c0_14 = arith.constant 0 : index
    %c0_15 = arith.constant 0 : index
    %18 = vector.load %arg8[%c0_13, %c0_14, %c0_15] : memref<1x1x128xf32, #tpu.memory_space<vmem>>, vector<1x1x128xf32>
    %19 = vector.shape_cast %18 : vector<1x1x128xf32> to vector<1x128xf32>
    %20 = vector.broadcast %19 : vector<1x128xf32> to vector<8x128xf32>
    %21 = arith.addf %17, %20 : vector<8x128xf32>
    %22 = arith.addf %21, %3 : vector<8x128xf32>
    %cst_16 = arith.constant 0.000000e+00 : f32
    %23 = vector.broadcast %cst_16 : f32 to vector<8x128xf32>
    %24 = arith.maximumf %22, %23 : vector<8x128xf32>
    %c0_17 = arith.constant 0 : index
    %c0_18 = arith.constant 0 : index
    %25 = vector.load %arg12[%c0_17, %c0_18] : memref<8x128xf32, #tpu.memory_space<vmem>>, vector<8x128xf32>
    tpu.vector_store %arg12[%c0_17, %c0_18], %24 {strides = array<i32>} : memref<8x128xf32, #tpu.memory_space<vmem>>, vector<8x128xf32>,
    %c1_i32 = arith.constant 1 : i32
    %26 = arith.cmpi eq, %arg1, %c1_i32 : i32
    %27 = arith.extui %26 : i1 to i32
    %c0_i32_19 = arith.constant 0 : i32
    %28 = arith.cmpi ne, %27, %c0_i32_19 : i32
    scf.if %28 {
      %c0_20 = arith.constant 0 : index
      %c0_21 = arith.constant 0 : index
      %29 = vector.load %arg12[%c0_20, %c0_21] : memref<8x128xf32, #tpu.memory_space<vmem>>, vector<8x128xf32>
      %30 = arith.truncf %29 : vector<8x128xf32> to vector<8x128xbf16>
      %c0_22 = arith.constant 0 : index
      %c0_23 = arith.constant 0 : index
      %31 = vector.load %arg9[%c0_22, %c0_23] : memref<128x128xbf16, #tpu.memory_space<vmem>>, vector<128x128xbf16>
      %cst_24 = arith.constant dense<0.000000e+00> : vector<8x128xf32>
      %32 = tpu.matmul %30, %31, %cst_24 {dimension_numbers = #tpu.dot_dimension_numbers<[1], [0], [0], [1], [0, 0, 1, 1], [], []>} : vector<8x128xbf16>, vector<128x128xbf16>, vector<8x128xf32> -> vector<8x128xf32>
      %c0_25 = arith.constant 0 : index
      %c0_26 = arith.constant 0 : index
      %33 = vector.load %arg10[%c0_25, %c0_26] : memref<1x128xf32, #tpu.memory_space<vmem>>, vector<1x128xf32>
      %34 = vector.broadcast %33 : vector<1x128xf32> to vector<8x128xf32>
      %35 = arith.addf %32, %34 : vector<8x128xf32>
      %c0_27 = arith.constant 0 : index
      %c0_28 = arith.constant 0 : index
      %36 = vector.load %arg11[%c0_27, %c0_28] : memref<8x128xf32, #tpu.memory_space<vmem>>, vector<8x128xf32>
      tpu.vector_store %arg11[%c0_27, %c0_28], %35 {strides = array<i32>} : memref<8x128xf32, #tpu.memory_space<vmem>>, vector<8x128xf32>,
    } else {
    }
    return
  }
  func.func @transform_0(%arg0: i32, %arg1: i32) -> (i32, i32) {
    %c0_i32 = arith.constant 0 : i32
    %c0_i32_0 = arith.constant 0 : i32
    return %arg0, %c0_i32 : i32, i32
  }
  func.func @transform_1(%arg0: i32, %arg1: i32) -> (i32, i32) {
    %c0_i32 = arith.constant 0 : i32
    %c0_i32_0 = arith.constant 0 : i32
    %c0_i32_1 = arith.constant 0 : i32
    return %c0_i32, %c0_i32_0 : i32, i32
  }
  func.func @transform_2(%arg0: i32, %arg1: i32) -> (i32, i32) {
    %c0_i32 = arith.constant 0 : i32
    %c0_i32_0 = arith.constant 0 : i32
    %c0_i32_1 = arith.constant 0 : i32
    return %c0_i32, %c0_i32_0 : i32, i32
  }
  func.func @transform_3(%arg0: i32, %arg1: i32) -> (i32, i32, i32) {
    %c0_i32 = arith.constant 0 : i32
    %c0_i32_0 = arith.constant 0 : i32
    %c0_i32_1 = arith.constant 0 : i32
    return %arg1, %c0_i32, %c0_i32_0 : i32, i32, i32
  }
  func.func @transform_4(%arg0: i32, %arg1: i32) -> (i32, i32, i32) {
    %c0_i32 = arith.constant 0 : i32
    %c0_i32_0 = arith.constant 0 : i32
    %c0_i32_1 = arith.constant 0 : i32
    return %arg1, %c0_i32, %c0_i32_0 : i32, i32, i32
  }
  func.func @transform_5(%arg0: i32, %arg1: i32) -> (i32, i32, i32) {
    %c0_i32 = arith.constant 0 : i32
    %c0_i32_0 = arith.constant 0 : i32
    %c0_i32_1 = arith.constant 0 : i32
    return %arg1, %c0_i32, %c0_i32_0 : i32, i32, i32
  }
  func.func @transform_6(%arg0: i32, %arg1: i32) -> (i32, i32, i32) {
    %c0_i32 = arith.constant 0 : i32
    %c0_i32_0 = arith.constant 0 : i32
    %c0_i32_1 = arith.constant 0 : i32
    return %arg1, %c0_i32, %c0_i32_0 : i32, i32, i32
  }
  func.func @transform_7(%arg0: i32, %arg1: i32) -> (i32, i32) {
    %c0_i32 = arith.constant 0 : i32
    %c0_i32_0 = arith.constant 0 : i32
    %c0_i32_1 = arith.constant 0 : i32
    return %c0_i32, %c0_i32_0 : i32, i32
  }
  func.func @transform_8(%arg0: i32, %arg1: i32) -> (i32, i32) {
    %c0_i32 = arith.constant 0 : i32
    %c0_i32_0 = arith.constant 0 : i32
    %c0_i32_1 = arith.constant 0 : i32
    return %c0_i32, %c0_i32_0 : i32, i32
  }
  func.func @transform_9(%arg0: i32, %arg1: i32) -> (i32, i32) {
    %c0_i32 = arith.constant 0 : i32
    %c0_i32_0 = arith.constant 0 : i32
    return %arg0, %c0_i32 : i32, i32
  }
}

</mosaic_0001>

<llo_original>
// kernel: tpu_custom_call.1
$region0: #{tpu_custom_call.1}
  #allocation0 [shape = 'u32[]', space=smem, size = 0x4, offset = 0x4, fixed_abs, tag = 'smem constant byte address 0x4 - core index']
  #allocation1 [shape = 'u32[72,128]{1,0:T(1,128)}', space=vmem, size = 0x9000, scoped, tag = 'internal scratch']
  #allocation2 [shape = 'f32[8,128]{1,0:T(8,128)}', space=vmem, size = 0x1000, scoped, tag = 'scratch operand']
  %s0 = inlined_call_operand.hbm [shape: f32[8,128], index: 0, kind: input, shape index: {}]
  %s1 = inlined_call_operand.hbm [shape: bf16[128,128], index: 1, kind: input, shape index: {}]
  %s2 = inlined_call_operand.hbm [shape: f32[1,128], index: 2, kind: input, shape index: {}]
  %s3 = inlined_call_operand.hbm [shape: bf16[2,128,128], index: 3, kind: input, shape index: {}]
  %s4 = inlined_call_operand.vmem [shape: f32[2,1,128], index: 4, kind: input, shape index: {}]
  %s5 = inlined_call_operand.hbm [shape: bf16[2,128,128], index: 5, kind: input, shape index: {}]
  %s6 = inlined_call_operand.vmem [shape: f32[2,1,128], index: 6, kind: input, shape index: {}]
  %s7 = inlined_call_operand.hbm [shape: bf16[128,128], index: 7, kind: input, shape index: {}]
  %s8 = inlined_call_operand.vmem [shape: f32[1,128], index: 8, kind: input, shape index: {}]
  %s9 = inlined_call_operand.hbm [shape: f32[8,128], index: 9, kind: output, shape index: {}]
  %s10 = sld [smem:[#allocation0]]
  $region101: #{tpu_custom_call.1} parent=0
    _
  %s12 = ssub.s32 1, %s10
  %s13 = scalar_select 0, %s12, %s10
  $region1: #{tpu_custom_call.1} parent=0
    #allocation3 [shape = 'u8[4096]{0}', space=vmem, size = 0x1000, scoped, tag = 'input window, operand 0, single buffered']
    #allocation4 [shape = 's32[2]{0}', space=sflag, size = 0x8, scoped, tag = 'scoped memory for tpu_custom_call.1']
    #allocation5 [shape = 's32[2]{0}', space=sflag, size = 0x8, scoped, tag = 'scoped memory for tpu_custom_call.1']
    #allocation6 [shape = 'u8[32768]{0}', space=vmem, size = 0x8000, scoped, tag = 'input window, operand 1, single buffered']
    #allocation7 [shape = 's32[1]{0}', space=sflag, size = 0x4, scoped, tag = 'scoped memory for tpu_custom_call.1']
    #allocation8 [shape = 'u8[512]{0}', space=vmem, size = 0x400, scoped, tag = 'input window, operand 2, single buffered']
    #allocation9 [shape = 'u8[65536]{0}', space=vmem, size = 0x10000, scoped, tag = 'input window, operand 3']
    #allocation10 [shape = 's32[2]{0}', space=sflag, size = 0x8, scoped, tag = 'scoped memory for tpu_custom_call.1']
    #allocation11 [shape = 'u8[65536]{0}', space=vmem, size = 0x10000, scoped, tag = 'input window, operand 5']
    #allocation12 [shape = 'u8[32768]{0}', space=vmem, size = 0x8000, scoped, tag = 'input window, operand 7, single buffered']
    #allocation13 [shape = 's32[1]{0}', space=sflag, size = 0x4, scoped, tag = 'scoped memory for tpu_custom_call.1']
    #allocation14 [shape = 'u8[4096]{0}', space=vmem, size = 0x1000, scoped, tag = 'output window, operand 0, single buffered']
    %14 = vsyncpa [#allocation4], 0
    %15 = vsyncpa [#allocation7], 0
    %16 = vsyncpa [#allocation10], 0
    %s17 = scalar_lea.sflag [#allocation10], 1
    %18 = vsyncpa %s17, 0
    %19 = vsyncpa [#allocation13], 0
    %20 = vsyncpa [#allocation5], 0
    loop: start=0, step=1, limit=4
    $region2: #{tpu_custom_call.1} parent=1 // loop_pre_header
      _
    $region3: #{tpu_custom_call.1} parent=1 // loop_header
      %s22 = sphi 0, %s26
      %p23 = scmp.ge.s32.totalorder %s22, 4
      %s29 = sphi 0, %s41
      %s30 = sphi 0, %s37
      %s31 = sphi 0, %s29
      %s32 = sphi 0, %s30
      %s33 = sphi 0, %s31
      %s34 = sphi 0, %s32
      %s44 = sphi 0, %s46
      %s47 = sphi 0, %s44
      %s48 = sphi 0, %s47
      %s64 = sphi 0, %s48
      %s68 = sphi 0, %s68
      %s70 = sphi 0, %s68
      %s71 = sphi 0, %s70
      %s85 = sphi 0, %s71
      %s89 = sphi 0, %s89
      %s91 = sphi 0, %s89
      %s92 = sphi 0, %s91
      %s106 = sphi 0, %s92
      %s112 = sphi 0, %s114
      %s115 = sphi 0, %s112
      %s116 = sphi 0, %s115
      %s132 = sphi 0, %s116
      %s138 = sphi 0, %s140
      %s141 = sphi 0, %s138
      %s142 = sphi 0, %s141
      %s158 = sphi 0, %s142
      %s164 = sphi 0, %s166
      %s167 = sphi 0, %s164
      %s168 = sphi 0, %s167
      %s184 = sphi 0, %s168
      %s190 = sphi 0, %s192
      %s193 = sphi 0, %s190
      %s194 = sphi 0, %s193
      %s210 = sphi 0, %s194
      %s214 = sphi 0, %s214
      %s216 = sphi 0, %s214
      %s217 = sphi 0, %s216
      %s231 = sphi 0, %s217
      %s235 = sphi 0, %s235
      %s237 = sphi 0, %s235
      %s238 = sphi 0, %s237
      %s252 = sphi 0, %s238
      %s258 = sphi 0, %s260
      %s261 = sphi 0, %s258
      %s262 = sphi 0, %s261
      %s278 = sphi 0, %s262
    $region4: #{tpu_custom_call.1} parent=1 // loop_header_branch
      %25 = sbr.rel (%p23) target = $region8
    $region5: #{tpu_custom_call.1} parent=1 // loop_body
      %s27 = ssub.s32 %s22, 1
      %s28 = ssub.s32 %s22, 2
      %s35 = sadd.s32 1, %s30
      %p36 = scmp.ge.s32.totalorder %s35, 2
      %s37 = scalar_select %p36, 0, %s35
      %s38 = sadd.s32 1, %s29
      %s39 = scalar_select %p36, %s38, %s29
      %p40 = scmp.ge.s32.totalorder %s39, 1
      %s41 = scalar_select %p40, 0, %s39
      %s42 = ssub.s32 %s29, %s41
      %p43 = scmp.eq.s32.totalorder %s42, 0
      %s45 = sadd.s32 %s44, 1
      %s46 = scalar_select %p43, %s44, %s45
      %p49 = pneg %p43
      %p50 = scmp.eq.s32.totalorder %s22, 1
      %p51 = por %p49, %p50
      %p52 = scmp.ne.s32.totalorder %s44, %s47
      %p53 = scmp.eq.s32.totalorder %s22, 0
      %p54 = por %p52, %p53
      %p55 = scmp.ne.s32.totalorder %s44, %s47
      %p56 = scmp.eq.s32.totalorder %s27, 1
      %p57 = por %p55, %p56
      %p58 = scmp.ne.s32.totalorder %s47, %s48
      %p59 = scmp.eq.s32.totalorder %s27, 0
      %p60 = por %p58, %p59
      %p61 = scmp.ne.s32.totalorder %s47, %s48
      %p62 = scmp.eq.s32.totalorder %s28, 1
      %p63 = por %p61, %p62
      %p65 = scmp.ne.s32.totalorder %s48, %s64
      %p66 = scmp.eq.s32.totalorder %s28, 0
      %p67 = por %p65, %p66
      %s69 = sadd.s32 %s68, 1
      %p72 = scmp.eq.s32.totalorder %s22, 1
      %p73 = scmp.ne.s32.totalorder %s68, %s70
      %p74 = scmp.eq.s32.totalorder %s22, 0
      %p75 = por %p73, %p74
      %p76 = scmp.ne.s32.totalorder %s68, %s70
      %p77 = scmp.eq.s32.totalorder %s27, 1
      %p78 = por %p76, %p77
      %p79 = scmp.ne.s32.totalorder %s70, %s71
      %p80 = scmp.eq.s32.totalorder %s27, 0
      %p81 = por %p79, %p80
      %p82 = scmp.ne.s32.totalorder %s70, %s71
      %p83 = scmp.eq.s32.totalorder %s28, 1
      %p84 = por %p82, %p83
      %p86 = scmp.ne.s32.totalorder %s71, %s85
      %p87 = scmp.eq.s32.totalorder %s28, 0
      %p88 = por %p86, %p87
      %s90 = sadd.s32 %s89, 1
      %p93 = scmp.eq.s32.totalorder %s22, 1
      %p94 = scmp.ne.s32.totalorder %s89, %s91
      %p95 = scmp.eq.s32.totalorder %s22, 0
      %p96 = por %p94, %p95
      %p97 = scmp.ne.s32.totalorder %s89, %s91
      %p98 = scmp.eq.s32.totalorder %s27, 1
      %p99 = por %p97, %p98
      %p100 = scmp.ne.s32.totalorder %s91, %s92
      %p101 = scmp.eq.s32.totalorder %s27, 0
      %p102 = por %p100, %p101
      %p103 = scmp.ne.s32.totalorder %s91, %s92
      %p104 = scmp.eq.s32.totalorder %s28, 1
      %p105 = por %p103, %p104
      %p107 = scmp.ne.s32.totalorder %s92, %s106
      %p108 = scmp.eq.s32.totalorder %s28, 0
      %p109 = por %p107, %p108
      %s110 = ssub.s32 %s30, %s37
      %p111 = scmp.eq.s32.totalorder %s110, 0
      %s113 = sadd.s32 %s112, 1
      %s114 = scalar_select %p111, %s112, %s113
      %p117 = pneg %p111
      %p118 = scmp.eq.s32.totalorder %s22, 1
      %p119 = por %p117, %p118
      %p120 = scmp.ne.s32.totalorder %s112, %s115
      %p121 = scmp.eq.s32.totalorder %s22, 0
      %p122 = por %p120, %p121
      %p123 = scmp.ne.s32.totalorder %s112, %s115
      %p124 = scmp.eq.s32.totalorder %s27, 1
      %p125 = por %p123, %p124
      %p126 = scmp.ne.s32.totalorder %s115, %s116
      %p127 = scmp.eq.s32.totalorder %s27, 0
      %p128 = por %p126, %p127
      %p129 = scmp.ne.s32.totalorder %s115, %s116
      %p130 = scmp.eq.s32.totalorder %s28, 1
      %p131 = por %p129, %p130
      %p133 = scmp.ne.s32.totalorder %s116, %s132
      %p134 = scmp.eq.s32.totalorder %s28, 0
      %p135 = por %p133, %p134
      %s136 = ssub.s32 %s30, %s37
      %p137 = scmp.eq.s32.totalorder %s136, 0
      %s139 = sadd.s32 %s138, 1
      %s140 = scalar_select %p137, %s138, %s139
      %p143 = pneg %p137
      %p144 = scmp.eq.s32.totalorder %s22, 1
      %p145 = por %p143, %p144
      %p146 = scmp.ne.s32.totalorder %s138, %s141
      %p147 = scmp.eq.s32.totalorder %s22, 0
      %p148 = por %p146, %p147
      %p149 = scmp.ne.s32.totalorder %s138, %s141
      %p150 = scmp.eq.s32.totalorder %s27, 1
      %p151 = por %p149, %p150
      %p152 = scmp.ne.s32.totalorder %s141, %s142
      %p153 = scmp.eq.s32.totalorder %s27, 0
      %p154 = por %p152, %p153
      %p155 = scmp.ne.s32.totalorder %s141, %s142
      %p156 = scmp.eq.s32.totalorder %s28, 1
      %p157 = por %p155, %p156
      %p159 = scmp.ne.s32.totalorder %s142, %s158
      %p160 = scmp.eq.s32.totalorder %s28, 0
      %p161 = por %p159, %p160
      %s162 = ssub.s32 %s30, %s37
      %p163 = scmp.eq.s32.totalorder %s162, 0
      %s165 = sadd.s32 %s164, 1
      %s166 = scalar_select %p163, %s164, %s165
      %p169 = pneg %p163
      %p170 = scmp.eq.s32.totalorder %s22, 1
      %p171 = por %p169, %p170
      %p172 = scmp.ne.s32.totalorder %s164, %s167
      %p173 = scmp.eq.s32.totalorder %s22, 0
      %p174 = por %p172, %p173
      %p175 = scmp.ne.s32.totalorder %s164, %s167
      %p176 = scmp.eq.s32.totalorder %s27, 1
      %p177 = por %p175, %p176
      %p178 = scmp.ne.s32.totalorder %s167, %s168
      %p179 = scmp.eq.s32.totalorder %s27, 0
      %p180 = por %p178, %p179
      %p181 = scmp.ne.s32.totalorder %s167, %s168
      %p182 = scmp.eq.s32.totalorder %s28, 1
      %p183 = por %p181, %p182
      %p185 = scmp.ne.s32.totalorder %s168, %s184
      %p186 = scmp.eq.s32.totalorder %s28, 0
      %p187 = por %p185, %p186
      %s188 = ssub.s32 %s30, %s37
      %p189 = scmp.eq.s32.totalorder %s188, 0
      %s191 = sadd.s32 %s190, 1
      %s192 = scalar_select %p189, %s190, %s191
      %p195 = pneg %p189
      %p196 = scmp.eq.s32.totalorder %s22, 1
      %p197 = por %p195, %p196
      %p198 = scmp.ne.s32.totalorder %s190, %s193
      %p199 = scmp.eq.s32.totalorder %s22, 0
      %p200 = por %p198, %p199
      %p201 = scmp.ne.s32.totalorder %s190, %s193
      %p202 = scmp.eq.s32.totalorder %s27, 1
      %p203 = por %p201, %p202
      %p204 = scmp.ne.s32.totalorder %s193, %s194
      %p205 = scmp.eq.s32.totalorder %s27, 0
      %p206 = por %p204, %p205
      %p207 = scmp.ne.s32.totalorder %s193, %s194
      %p208 = scmp.eq.s32.totalorder %s28, 1
      %p209 = por %p207, %p208
      %p211 = scmp.ne.s32.totalorder %s194, %s210
      %p212 = scmp.eq.s32.totalorder %s28, 0
      %p213 = por %p211, %p212
      %s215 = sadd.s32 %s214, 1
      %p218 = scmp.eq.s32.totalorder %s22, 1
      %p219 = scmp.ne.s32.totalorder %s214, %s216
      %p220 = scmp.eq.s32.totalorder %s22, 0
      %p221 = por %p219, %p220
      %p222 = scmp.ne.s32.totalorder %s214, %s216
      %p223 = scmp.eq.s32.totalorder %s27, 1
      %p224 = por %p222, %p223
      %p225 = scmp.ne.s32.totalorder %s216, %s217
      %p226 = scmp.eq.s32.totalorder %s27, 0
      %p227 = por %p225, %p226
      %p228 = scmp.ne.s32.totalorder %s216, %s217
      %p229 = scmp.eq.s32.totalorder %s28, 1
      %p230 = por %p228, %p229
      %p232 = scmp.ne.s32.totalorder %s217, %s231
      %p233 = scmp.eq.s32.totalorder %s28, 0
      %p234 = por %p232, %p233
      %s236 = sadd.s32 %s235, 1
      %p239 = scmp.eq.s32.totalorder %s22, 1
      %p240 = scmp.ne.s32.totalorder %s235, %s237
      %p241 = scmp.eq.s32.totalorder %s22, 0
      %p242 = por %p240, %p241
      %p243 = scmp.ne.s32.totalorder %s235, %s237
      %p244 = scmp.eq.s32.totalorder %s27, 1
      %p245 = por %p243, %p244
      %p246 = scmp.ne.s32.totalorder %s237, %s238
      %p247 = scmp.eq.s32.totalorder %s27, 0
      %p248 = por %p246, %p247
      %p249 = scmp.ne.s32.totalorder %s237, %s238
      %p250 = scmp.eq.s32.totalorder %s28, 1
      %p251 = por %p249, %p250
      %p253 = scmp.ne.s32.totalorder %s238, %s252
      %p254 = scmp.eq.s32.totalorder %s28, 0
      %p255 = por %p253, %p254
      %s256 = ssub.s32 %s29, %s41
      %p257 = scmp.eq.s32.totalorder %s256, 0
      %s259 = sadd.s32 %s258, 1
      %s260 = scalar_select %p257, %s258, %s259
      %p263 = pneg %p257
      %p264 = scmp.eq.s32.totalorder %s22, 1
      %p265 = por %p263, %p264
      %p266 = scmp.ne.s32.totalorder %s258, %s261
      %p267 = scmp.eq.s32.totalorder %s22, 0
      %p268 = por %p266, %p267
      %p269 = scmp.ne.s32.totalorder %s258, %s261
      %p270 = scmp.eq.s32.totalorder %s27, 1
      %p271 = por %p269, %p270
      %p272 = scmp.ne.s32.totalorder %s261, %s262
      %p273 = scmp.eq.s32.totalorder %s27, 0
      %p274 = por %p272, %p273
      %p275 = scmp.ne.s32.totalorder %s261, %s262
      %p276 = scmp.eq.s32.totalorder %s28, 1
      %p277 = por %p275, %p276
      %p279 = scmp.ne.s32.totalorder %s262, %s278
      %p280 = scmp.eq.s32.totalorder %s28, 0
      %p281 = por %p279, %p280
      %p282 = scmp.le.s32.totalorder 1, %s22
      %p283 = scmp.lt.s32.totalorder %s22, 3
      %p284 = pnand %p282, %p283
      %p285 = pneg %p284
      // Predicated region
      $region9: #{tpu_custom_call.1} parent=5 // pred_check
        _
      $region10: #{tpu_custom_call.1} parent=5 // pred_check_branch
        %287 = sbr.rel (%p284) target = $region12
      $region11: #{tpu_custom_call.1} parent=5 // pred_region
        %s288 = ssub.s32 %s22, 1
        // Predicated region
        $region13: #{tpu_custom_call.1} parent=11 // pred_check
          %p289 = pneg %p60
        $region14: #{tpu_custom_call.1} parent=11 // pred_check_branch
          %291 = sbr.rel (%p289) target = $region16
        $region15: #{tpu_custom_call.1} parent=11 // pred_region
          %293 = vsyncadd [#allocation4], 0
          %s294 = smul.addr %s31, 8
          %s295 = scalar_lea.hbm %s0, %s294
          %s297 = sshll.u32 %s295, 4
          %s298 = int_to_ptr.hbm [resolvable:$true] %s297
          %s299 = sshll.u32 [#allocation3], 4
          %s300 = int_to_ptr.vmem [resolvable:$true] %s299
          %302 = dma.hbm_to_vmem [thread:$0]  %s298, 128, %s300, [#allocation4]
        $region16: #{tpu_custom_call.1} parent=11 // pred_fallthru
          _
        // Predicated region
        $region17: #{tpu_custom_call.1} parent=11 // pred_check
          %p303 = pneg %p81
        $region18: #{tpu_custom_call.1} parent=11 // pred_check_branch
          %305 = sbr.rel (%p303) target = $region20
        $region19: #{tpu_custom_call.1} parent=11 // pred_region
          %307 = vsyncadd [#allocation7], 0
          %s308 = sshll.u32 %s1, 4
          %s309 = int_to_ptr.hbm [resolvable:$true] %s308
          %s310 = sshll.u32 [#allocation6], 4
          %s311 = int_to_ptr.vmem [resolvable:$true] %s310
          %316 = dma.hbm_to_vmem [thread:$0]  %s309, 1024, %s311, [#allocation7], 64, 64, 4
        $region20: #{tpu_custom_call.1} parent=11 // pred_fallthru
          _
        // Predicated region
        $region21: #{tpu_custom_call.1} parent=11 // pred_check
          %p317 = pneg %p102
        $region22: #{tpu_custom_call.1} parent=11 // pred_check_branch
          %319 = sbr.rel (%p317) target = $region24
        $region23: #{tpu_custom_call.1} parent=11 // pred_region
          %321 = vsyncadd [#allocation7], 0
          %s323 = sshll.u32 %s2, 4
          %s324 = int_to_ptr.hbm [resolvable:$true] %s323
          %s325 = sshll.u32 [#allocation8], 4
          %s326 = int_to_ptr.vmem [resolvable:$true] %s325
          %328 = dma.hbm_to_vmem [thread:$0]  %s324, 16, %s326, [#allocation7]
        $region24: #{tpu_custom_call.1} parent=11 // pred_fallthru
          _
        // Predicated region
        $region25: #{tpu_custom_call.1} parent=11 // pred_check
          %p329 = pneg %p227
        $region26: #{tpu_custom_call.1} parent=11 // pred_check_branch
          %331 = sbr.rel (%p329) target = $region28
        $region27: #{tpu_custom_call.1} parent=11 // pred_region
          %333 = vsyncadd [#allocation13], 0
          %s334 = sshll.u32 %s7, 4
          %s335 = int_to_ptr.hbm [resolvable:$true] %s334
          %s336 = sshll.u32 [#allocation12], 4
          %s337 = int_to_ptr.vmem [resolvable:$true] %s336
          %342 = dma.hbm_to_vmem [thread:$0]  %s335, 1024, %s337, [#allocation13], 64, 64, 4
        $region28: #{tpu_custom_call.1} parent=11 // pred_fallthru
          _
        // Predicated region
        $region29: #{tpu_custom_call.1} parent=11 // pred_check
          %p343 = pneg %p248
        $region30: #{tpu_custom_call.1} parent=11 // pred_check_branch
          %345 = sbr.rel (%p343) target = $region32
        $region31: #{tpu_custom_call.1} parent=11 // pred_region
          _
        $region32: #{tpu_custom_call.1} parent=11 // pred_fallthru
          _
      $region12: #{tpu_custom_call.1} parent=5 // pred_fallthru
        _
      %p346 = scmp.lt.s32.totalorder %s22, 2
      // Predicated region
      $region33: #{tpu_custom_call.1} parent=5 // pred_check
        %p347 = pneg %p346
      $region34: #{tpu_custom_call.1} parent=5 // pred_check_branch
        %349 = sbr.rel (%p347) target = $region36
      $region35: #{tpu_custom_call.1} parent=5 // pred_region
        // Predicated region
        $region37: #{tpu_custom_call.1} parent=35 // pred_check
          %p350 = pneg %p122
        $region38: #{tpu_custom_call.1} parent=35 // pred_check_branch
          %352 = sbr.rel (%p350) target = $region40
        $region39: #{tpu_custom_call.1} parent=35 // pred_region
          %s353 = sand.u32 %s22, 1
          %s354 = scalar_lea.sflag [#allocation10], %s353
          %s355 = sand.u32 %s112, 1
          %s356 = smul.addr %s355, 64
          %s357 = scalar_lea.vmem [#allocation9], %s356
          %359 = vsyncadd %s354, 0
          %s360 = smul.addr %s30, 16
          %s361 = smul.addr %s360, 4
          %s362 = scalar_lea.hbm %s3, %s361
          %s363 = sshll.u32 %s362, 4
          %s364 = int_to_ptr.hbm [resolvable:$true] %s363
          %s365 = sshll.u32 %s357, 4
          %s366 = int_to_ptr.vmem [resolvable:$true] %s365
          %371 = dma.hbm_to_vmem [thread:$0]  %s364, 1024, %s366, %s354, 64, 64, 4
        $region40: #{tpu_custom_call.1} parent=35 // pred_fallthru
          _
        // Predicated region
        $region41: #{tpu_custom_call.1} parent=35 // pred_check
          %p372 = pneg %p148
        $region42: #{tpu_custom_call.1} parent=35 // pred_check_branch
          %374 = sbr.rel (%p372) target = $region44
        $region43: #{tpu_custom_call.1} parent=35 // pred_region
          %p375 = scmp.lt.s32.totalorder %s30, 1
          %s376 = scalar_select %p375, %s30, 1
          %s377 = scalar_lea.vmem %s4, %s376
        $region44: #{tpu_custom_call.1} parent=35 // pred_fallthru
          _
        // Predicated region
        $region45: #{tpu_custom_call.1} parent=35 // pred_check
          %p378 = pneg %p174
        $region46: #{tpu_custom_call.1} parent=35 // pred_check_branch
          %380 = sbr.rel (%p378) target = $region48
        $region47: #{tpu_custom_call.1} parent=35 // pred_region
          %s381 = sand.u32 %s22, 1
          %s382 = scalar_lea.sflag [#allocation10], %s381
          %s383 = sand.u32 %s164, 1
          %s384 = smul.addr %s383, 64
          %s385 = scalar_lea.vmem [#allocation11], %s384
          %387 = vsyncadd %s382, 0
          %s388 = smul.addr %s30, 16
          %s389 = smul.addr %s388, 4
          %s390 = scalar_lea.hbm %s5, %s389
          %s391 = sshll.u32 %s390, 4
          %s392 = int_to_ptr.hbm [resolvable:$true] %s391
          %s393 = sshll.u32 %s385, 4
          %s394 = int_to_ptr.vmem [resolvable:$true] %s393
          %399 = dma.hbm_to_vmem [thread:$0]  %s392, 1024, %s394, %s382, 64, 64, 4
        $region48: #{tpu_custom_call.1} parent=35 // pred_fallthru
          _
        // Predicated region
        $region49: #{tpu_custom_call.1} parent=35 // pred_check
          %p400 = pneg %p200
        $region50: #{tpu_custom_call.1} parent=35 // pred_check_branch
          %402 = sbr.rel (%p400) target = $region52
        $region51: #{tpu_custom_call.1} parent=35 // pred_region
          %p403 = scmp.lt.s32.totalorder %s30, 1
          %s404 = scalar_select %p403, %s30, 1
          %s405 = scalar_lea.vmem %s6, %s404
        $region52: #{tpu_custom_call.1} parent=35 // pred_fallthru
          _
      $region36: #{tpu_custom_call.1} parent=5 // pred_fallthru
        _
      %p406 = scmp.le.s32.totalorder 1, %s22
      %p407 = scmp.lt.s32.totalorder %s22, 3
      %p408 = pnand %p406, %p407
      %p409 = pneg %p408
      // Predicated region
      $region53: #{tpu_custom_call.1} parent=5 // pred_check
        _
      $region54: #{tpu_custom_call.1} parent=5 // pred_check_branch
        %411 = sbr.rel (%p408) target = $region56
      $region55: #{tpu_custom_call.1} parent=5 // pred_region
        %s412 = ssub.s32 %s22, 1
        // Predicated region
        $region57: #{tpu_custom_call.1} parent=55 // pred_check
          %p413 = pneg %p60
        $region58: #{tpu_custom_call.1} parent=55 // pred_check_branch
          %415 = sbr.rel (%p413) target = $region60
        $region59: #{tpu_custom_call.1} parent=55 // pred_region
          %417 = dma.done [#allocation4], 128
        $region60: #{tpu_custom_call.1} parent=55 // pred_fallthru
          _
        // Predicated region
        $region61: #{tpu_custom_call.1} parent=55 // pred_check
          %p418 = pneg %p81
        $region62: #{tpu_custom_call.1} parent=55 // pred_check_branch
          %420 = sbr.rel (%p418) target = $region64
        $region63: #{tpu_custom_call.1} parent=55 // pred_region
          %422 = dma.done [#allocation7], 1024
        $region64: #{tpu_custom_call.1} parent=55 // pred_fallthru
          _
        // Predicated region
        $region65: #{tpu_custom_call.1} parent=55 // pred_check
          %p423 = pneg %p102
        $region66: #{tpu_custom_call.1} parent=55 // pred_check_branch
          %425 = sbr.rel (%p423) target = $region68
        $region67: #{tpu_custom_call.1} parent=55 // pred_region
          %427 = dma.done [#allocation7], 16
        $region68: #{tpu_custom_call.1} parent=55 // pred_fallthru
          _
        %s428 = sand.u32 %s27, 1
        %s429 = scalar_lea.sflag [#allocation10], %s428
        %s430 = sand.u32 %s115, 1
        %s431 = smul.addr %s430, 64
        %s432 = scalar_lea.vmem [#allocation9], %s431
        // Predicated region
        $region69: #{tpu_custom_call.1} parent=55 // pred_check
          %p433 = pneg %p128
        $region70: #{tpu_custom_call.1} parent=55 // pred_check_branch
          %435 = sbr.rel (%p433) target = $region72
        $region71: #{tpu_custom_call.1} parent=55 // pred_region
          %437 = dma.done %s429, 1024
        $region72: #{tpu_custom_call.1} parent=55 // pred_fallthru
          _
        %s438 = sand.u32 %s27, 1
        %s439 = scalar_lea.sflag [#allocation10], %s438
        %s440 = sand.u32 %s167, 1
        %s441 = smul.addr %s440, 64
        %s442 = scalar_lea.vmem [#allocation11], %s441
        // Predicated region
        $region73: #{tpu_custom_call.1} parent=55 // pred_check
          %p443 = pneg %p180
        $region74: #{tpu_custom_call.1} parent=55 // pred_check_branch
          %445 = sbr.rel (%p443) target = $region76
        $region75: #{tpu_custom_call.1} parent=55 // pred_region
          %447 = dma.done %s439, 1024
        $region76: #{tpu_custom_call.1} parent=55 // pred_fallthru
          _
        // Predicated region
        $region77: #{tpu_custom_call.1} parent=55 // pred_check
          %p448 = pneg %p227
        $region78: #{tpu_custom_call.1} parent=55 // pred_check_branch
          %450 = sbr.rel (%p448) target = $region80
        $region79: #{tpu_custom_call.1} parent=55 // pred_region
          %452 = dma.done [#allocation13], 1024
        $region80: #{tpu_custom_call.1} parent=55 // pred_fallthru
          _
        %p453 = pneg %p60
        %p454 = pneg %p57
        %p455 = pneg %p81
        %p456 = pneg %p78
        %p457 = pneg %p102
        %p458 = pneg %p99
        %s459 = sand.u32 %s27, 1
        %s460 = scalar_lea.sflag [#allocation10], %s459
        %s461 = sand.u32 %s115, 1
        %s462 = smul.addr %s461, 64
        %s463 = scalar_lea.vmem [#allocation9], %s462
        %p464 = pneg %p128
        %p465 = pneg %p125
        %p466 = scmp.lt.s32.totalorder %s32, 1
        %s467 = scalar_select %p466, %s32, 1
        %s468 = scalar_lea.vmem %s4, %s467
        %p469 = pneg %p154
        %p470 = pneg %p151
        %s471 = sand.u32 %s27, 1
        %s472 = scalar_lea.sflag [#allocation10], %s471
        %s473 = sand.u32 %s167, 1
        %s474 = smul.addr %s473, 64
        %s475 = scalar_lea.vmem [#allocation11], %s474
        %p476 = pneg %p180
        %p477 = pneg %p177
        %p478 = scmp.lt.s32.totalorder %s32, 1
        %s479 = scalar_select %p478, %s32, 1
        %s480 = scalar_lea.vmem %s6, %s479
        %p481 = pneg %p206
        %p482 = pneg %p203
        %p483 = pneg %p227
        %p484 = pneg %p224
        %p485 = pneg %p248
        %p486 = pneg %p245
        %p487 = pneg %p274
        %p488 = pneg %p271
        %p489 = scmp.lt.s32.totalorder %s32, 1
        %s490 = scalar_select %p489, %s32, 1
        %s491 = scalar_lea.vmem %s4, %s490
        %p492 = scmp.lt.s32.totalorder %s32, 1
        %s493 = scalar_select %p492, %s32, 1
        %s494 = scalar_lea.vmem %s6, %s493
        %p495 = scmp.eq.s32.totalorder %s32, 0
        // Predicated region
        $region81: #{tpu_custom_call.1} parent=55 // pred_check
          %p496 = pneg %p495
        $region82: #{tpu_custom_call.1} parent=55 // pred_check_branch
          %498 = sbr.rel (%p496) target = $region84
        $region83: #{tpu_custom_call.1} parent=55 // pred_region
          %v499 = vld [vmem:[#allocation3] sm:$0xff]
          %v500 = vpack.c.bf16 %v499, %v499
          %v501 = vld [vmem:[#allocation6] sm:$0xf]
          %v502 = vld [vmem:[#allocation6 + $0x4] sm:$0xf]
          %v503 = vld [vmem:[#allocation6 + $0x8] sm:$0xf]
          %v504 = vld [vmem:[#allocation6 + $0xc] sm:$0xf]
          %v505 = vld [vmem:[#allocation6 + $0x10] sm:$0xf]
          %v506 = vld [vmem:[#allocation6 + $0x14] sm:$0xf]
          %v507 = vld [vmem:[#allocation6 + $0x18] sm:$0xf]
          %v508 = vld [vmem:[#allocation6 + $0x1c] sm:$0xf]
          %v509 = vld [vmem:[#allocation6 + $0x20] sm:$0xf]
          %v510 = vld [vmem:[#allocation6 + $0x24] sm:$0xf]
          %v511 = vld [vmem:[#allocation6 + $0x28] sm:$0xf]
          %v512 = vld [vmem:[#allocation6 + $0x2c] sm:$0xf]
          %v513 = vld [vmem:[#allocation6 + $0x30] sm:$0xf]
          %v514 = vld [vmem:[#allocation6 + $0x34] sm:$0xf]
          %v515 = vld [vmem:[#allocation6 + $0x38] sm:$0xf]
          %v516 = vld [vmem:[#allocation6 + $0x3c] sm:$0xf]
          %v517 = vld [vmem:[#allocation8] sm:$0x1]
          %v519 = vperm.slane %v517, 0
          %v537 = vunpack.c.l.b16 %v501
          %v538 = vunpack.c.l.b16 %v502
          %v539 = vunpack.c.l.b16 %v503
          %v540 = vunpack.c.l.b16 %v504
          %v541 = vunpack.c.l.b16 %v505
          %v542 = vunpack.c.l.b16 %v506
          %v543 = vunpack.c.l.b16 %v507
          %v544 = vunpack.c.l.b16 %v508
          %v545 = vunpack.c.l.b16 %v509
          %v546 = vunpack.c.l.b16 %v510
          %v547 = vunpack.c.l.b16 %v511
          %v548 = vunpack.c.l.b16 %v512
          %v549 = vunpack.c.l.b16 %v513
          %v550 = vunpack.c.l.b16 %v514
          %v551 = vunpack.c.l.b16 %v515
          %v552 = vunpack.c.l.b16 %v516
          %v553 = vpack.c.b16 %v538, %v537
          %v554 = vpack.c.b16 %v540, %v539
          %v555 = vpack.c.b16 %v542, %v541
          %v556 = vpack.c.b16 %v544, %v543
          %v557 = vpack.c.b16 %v546, %v545
          %v558 = vpack.c.b16 %v548, %v547
          %v559 = vpack.c.b16 %v550, %v549
          %v560 = vpack.c.b16 %v552, %v551
          %569 = vmatpush.bf16.msra.mxu0 %v560
          %570 = vmatpush.bf16.msra.mxu0 %v559
          %571 = vmatpush.bf16.msra.mxu0 %v558
          %572 = vmatpush.bf16.msra.mxu0 %v557
          %573 = vmatpush.bf16.msra.mxu0 %v556
          %574 = vmatpush.bf16.msra.mxu0 %v555
          %575 = vmatpush.bf16.msra.mxu0 %v554
          %576 = vmatpush.bf16.msra.mxu0 %v553
          %577 = vmatmul.bf16.gmra.mxu0 %v500
          %v578 = vpop.f32.mrf.mxu0
          %v579 = vadd.f32 %v519, %v578
          %v580 = vpop.f32.mrf.mxu0
          %581 = vdwg.mxu0
          %v582 = vmax.f32 %v579, 0.0
          %583 = vst [vmem:[#allocation2] sm:$0xff] %v582
        $region84: #{tpu_custom_call.1} parent=55 // pred_fallthru
          _
        %v584 = vld [vmem:[#allocation2] sm:$0xff]
        %v585 = vpack.c.bf16 %v584, %v584
        %v586 = vld [vmem:[%s432] sm:$0xf]
        %v587 = vld [vmem:[%s432 + $0x4] sm:$0xf]
        %v588 = vld [vmem:[%s432 + $0x8] sm:$0xf]
        %v589 = vld [vmem:[%s432 + $0xc] sm:$0xf]
        %v590 = vld [vmem:[%s432 + $0x10] sm:$0xf]
        %v591 = vld [vmem:[%s432 + $0x14] sm:$0xf]
        %v592 = vld [vmem:[%s432 + $0x18] sm:$0xf]
        %v593 = vld [vmem:[%s432 + $0x1c] sm:$0xf]
        %v594 = vld [vmem:[%s432 + $0x20] sm:$0xf]
        %v595 = vld [vmem:[%s432 + $0x24] sm:$0xf]
        %v596 = vld [vmem:[%s432 + $0x28] sm:$0xf]
        %v597 = vld [vmem:[%s432 + $0x2c] sm:$0xf]
        %v598 = vld [vmem:[%s432 + $0x30] sm:$0xf]
        %v599 = vld [vmem:[%s432 + $0x34] sm:$0xf]
        %v600 = vld [vmem:[%s432 + $0x38] sm:$0xf]
        %v601 = vld [vmem:[%s432 + $0x3c] sm:$0xf]
        %v602 = vld [vmem:[%s491] sm:$0x1]
        %v604 = vperm.slane %v602, 0
        %v622 = vunpack.c.l.b16 %v586
        %v623 = vunpack.c.l.b16 %v587
        %v624 = vunpack.c.l.b16 %v588
        %v625 = vunpack.c.l.b16 %v589
        %v626 = vunpack.c.l.b16 %v590
        %v627 = vunpack.c.l.b16 %v591
        %v628 = vunpack.c.l.b16 %v592
        %v629 = vunpack.c.l.b16 %v593
        %v630 = vunpack.c.l.b16 %v594
        %v631 = vunpack.c.l.b16 %v595
        %v632 = vunpack.c.l.b16 %v596
        %v633 = vunpack.c.l.b16 %v597
        %v634 = vunpack.c.l.b16 %v598
        %v635 = vunpack.c.l.b16 %v599
        %v636 = vunpack.c.l.b16 %v600
        %v637 = vunpack.c.l.b16 %v601
        %v638 = vpack.c.b16 %v623, %v622
        %v639 = vpack.c.b16 %v625, %v624
        %v640 = vpack.c.b16 %v627, %v626
        %v641 = vpack.c.b16 %v629, %v628
        %v642 = vpack.c.b16 %v631, %v630
        %v643 = vpack.c.b16 %v633, %v632
        %v644 = vpack.c.b16 %v635, %v634
        %v645 = vpack.c.b16 %v637, %v636
        %654 = vmatpush.bf16.msra.mxu0 %v645
        %655 = vmatpush.bf16.msra.mxu0 %v644
        %656 = vmatpush.bf16.msra.mxu0 %v643
        %657 = vmatpush.bf16.msra.mxu0 %v642
        %658 = vmatpush.bf16.msra.mxu0 %v641
        %659 = vmatpush.bf16.msra.mxu0 %v640
        %660 = vmatpush.bf16.msra.mxu0 %v639
        %661 = vmatpush.bf16.msra.mxu0 %v638
        %662 = vmatmul.bf16.gmra.mxu0 %v585
        %v663 = vpop.f32.mrf.mxu0
        %v664 = vadd.f32 %v604, %v663
        %v665 = vpop.f32.mrf.mxu0
        %666 = vdwg.mxu0
        %v667 = vmax.f32 %v664, 0.0
        %v668 = vpack.c.bf16 %v667, %v667
        %v669 = vld [vmem:[%s442] sm:$0xf]
        %v670 = vld [vmem:[%s442 + $0x4] sm:$0xf]
        %v671 = vld [vmem:[%s442 + $0x8] sm:$0xf]
        %v672 = vld [vmem:[%s442 + $0xc] sm:$0xf]
        %v673 = vld [vmem:[%s442 + $0x10] sm:$0xf]
        %v674 = vld [vmem:[%s442 + $0x14] sm:$0xf]
        %v675 = vld [vmem:[%s442 + $0x18] sm:$0xf]
        %v676 = vld [vmem:[%s442 + $0x1c] sm:$0xf]
        %v677 = vld [vmem:[%s442 + $0x20] sm:$0xf]
        %v678 = vld [vmem:[%s442 + $0x24] sm:$0xf]
        %v679 = vld [vmem:[%s442 + $0x28] sm:$0xf]
        %v680 = vld [vmem:[%s442 + $0x2c] sm:$0xf]
        %v681 = vld [vmem:[%s442 + $0x30] sm:$0xf]
        %v682 = vld [vmem:[%s442 + $0x34] sm:$0xf]
        %v683 = vld [vmem:[%s442 + $0x38] sm:$0xf]
        %v684 = vld [vmem:[%s442 + $0x3c] sm:$0xf]
        %v685 = vld [vmem:[%s494] sm:$0x1]
        %v687 = vperm.slane %v685, 0
        %v705 = vunpack.c.l.b16 %v669
        %v706 = vunpack.c.l.b16 %v670
        %v707 = vunpack.c.l.b16 %v671
        %v708 = vunpack.c.l.b16 %v672
        %v709 = vunpack.c.l.b16 %v673
        %v710 = vunpack.c.l.b16 %v674
        %v711 = vunpack.c.l.b16 %v675
        %v712 = vunpack.c.l.b16 %v676
        %v713 = vunpack.c.l.b16 %v677
        %v714 = vunpack.c.l.b16 %v678
        %v715 = vunpack.c.l.b16 %v679
        %v716 = vunpack.c.l.b16 %v680
        %v717 = vunpack.c.l.b16 %v681
        %v718 = vunpack.c.l.b16 %v682
        %v719 = vunpack.c.l.b16 %v683
        %v720 = vunpack.c.l.b16 %v684
        %v721 = vpack.c.b16 %v706, %v705
        %v722 = vpack.c.b16 %v708, %v707
        %v723 = vpack.c.b16 %v710, %v709
        %v724 = vpack.c.b16 %v712, %v711
        %v725 = vpack.c.b16 %v714, %v713
        %v726 = vpack.c.b16 %v716, %v715
        %v727 = vpack.c.b16 %v718, %v717
        %v728 = vpack.c.b16 %v720, %v719
        %737 = vmatpush.bf16.msra.mxu0 %v728
        %738 = vmatpush.bf16.msra.mxu0 %v727
        %739 = vmatpush.bf16.msra.mxu0 %v726
        %740 = vmatpush.bf16.msra.mxu0 %v725
        %741 = vmatpush.bf16.msra.mxu0 %v724
        %742 = vmatpush.bf16.msra.mxu0 %v723
        %743 = vmatpush.bf16.msra.mxu0 %v722
        %744 = vmatpush.bf16.msra.mxu0 %v721
        %745 = vmatmul.bf16.gmra.mxu0 %v668
        %v746 = vpop.f32.mrf.mxu0
        %v747 = vadd.f32 %v687, %v746
        %v748 = vpop.f32.mrf.mxu0
        %749 = vdwg.mxu0
        %v750 = vadd.f32 %v747, %v584
        %v751 = vmax.f32 %v750, 0.0
        %752 = vst [vmem:[#allocation2] sm:$0xff] %v751
        %p753 = scmp.eq.s32.totalorder %s32, 1
        // Predicated region
        $region85: #{tpu_custom_call.1} parent=55 // pred_check
          %p754 = pneg %p753
        $region86: #{tpu_custom_call.1} parent=55 // pred_check_branch
          %756 = sbr.rel (%p754) target = $region88
        $region87: #{tpu_custom_call.1} parent=55 // pred_region
          %v757 = vld [vmem:[#allocation2] sm:$0xff]
          %v758 = vpack.c.bf16 %v757, %v757
          %v759 = vld [vmem:[#allocation12] sm:$0xf]
          %v760 = vld [vmem:[#allocation12 + $0x4] sm:$0xf]
          %v761 = vld [vmem:[#allocation12 + $0x8] sm:$0xf]
          %v762 = vld [vmem:[#allocation12 + $0xc] sm:$0xf]
          %v763 = vld [vmem:[#allocation12 + $0x10] sm:$0xf]
          %v764 = vld [vmem:[#allocation12 + $0x14] sm:$0xf]
          %v765 = vld [vmem:[#allocation12 + $0x18] sm:$0xf]
          %v766 = vld [vmem:[#allocation12 + $0x1c] sm:$0xf]
          %v767 = vld [vmem:[#allocation12 + $0x20] sm:$0xf]
          %v768 = vld [vmem:[#allocation12 + $0x24] sm:$0xf]
          %v769 = vld [vmem:[#allocation12 + $0x28] sm:$0xf]
          %v770 = vld [vmem:[#allocation12 + $0x2c] sm:$0xf]
          %v771 = vld [vmem:[#allocation12 + $0x30] sm:$0xf]
          %v772 = vld [vmem:[#allocation12 + $0x34] sm:$0xf]
          %v773 = vld [vmem:[#allocation12 + $0x38] sm:$0xf]
          %v774 = vld [vmem:[#allocation12 + $0x3c] sm:$0xf]
          %v775 = vld [vmem:[%s8] sm:$0x1]
          %v777 = vperm.slane %v775, 0
          %v795 = vunpack.c.l.b16 %v759
          %v796 = vunpack.c.l.b16 %v760
          %v797 = vunpack.c.l.b16 %v761
          %v798 = vunpack.c.l.b16 %v762
          %v799 = vunpack.c.l.b16 %v763
          %v800 = vunpack.c.l.b16 %v764
          %v801 = vunpack.c.l.b16 %v765
          %v802 = vunpack.c.l.b16 %v766
          %v803 = vunpack.c.l.b16 %v767
          %v804 = vunpack.c.l.b16 %v768
          %v805 = vunpack.c.l.b16 %v769
          %v806 = vunpack.c.l.b16 %v770
          %v807 = vunpack.c.l.b16 %v771
          %v808 = vunpack.c.l.b16 %v772
          %v809 = vunpack.c.l.b16 %v773
          %v810 = vunpack.c.l.b16 %v774
          %v811 = vpack.c.b16 %v796, %v795
          %v812 = vpack.c.b16 %v798, %v797
          %v813 = vpack.c.b16 %v800, %v799
          %v814 = vpack.c.b16 %v802, %v801
          %v815 = vpack.c.b16 %v804, %v803
          %v816 = vpack.c.b16 %v806, %v805
          %v817 = vpack.c.b16 %v808, %v807
          %v818 = vpack.c.b16 %v810, %v809
          %827 = vmatpush.bf16.msra.mxu0 %v818
          %828 = vmatpush.bf16.msra.mxu0 %v817
          %829 = vmatpush.bf16.msra.mxu0 %v816
          %830 = vmatpush.bf16.msra.mxu0 %v815
          %831 = vmatpush.bf16.msra.mxu0 %v814
          %832 = vmatpush.bf16.msra.mxu0 %v813
          %833 = vmatpush.bf16.msra.mxu0 %v812
          %834 = vmatpush.bf16.msra.mxu0 %v811
          %835 = vmatmul.bf16.gmra.mxu0 %v758
          %v836 = vpop.f32.mrf.mxu0
          %v837 = vadd.f32 %v777, %v836
          %v838 = vpop.f32.mrf.mxu0
          %839 = vdwg.mxu0
          %840 = vst [vmem:[#allocation14] sm:$0xff] %v837
        $region88: #{tpu_custom_call.1} parent=55 // pred_fallthru
          _
        // Predicated region
        $region89: #{tpu_custom_call.1} parent=55 // pred_check
          %p841 = pneg %p271
        $region90: #{tpu_custom_call.1} parent=55 // pred_check_branch
          %843 = sbr.rel (%p841) target = $region92
        $region91: #{tpu_custom_call.1} parent=55 // pred_region
          %845 = vsyncadd [#allocation5], 0
          %s846 = smul.addr %s31, 8
          %s847 = scalar_lea.hbm %s9, %s846
          %s849 = sshll.u32 [#allocation14], 4
          %s850 = int_to_ptr.vmem [resolvable:$true] %s849
          %s851 = sshll.u32 %s847, 4
          %s852 = int_to_ptr.hbm [resolvable:$true] %s851
          %854 = dma.vmem_to_hbm [thread:$0]  %s850, 128, %s852, [#allocation5]
        $region92: #{tpu_custom_call.1} parent=55 // pred_fallthru
          _
        // Predicated region
        $region93: #{tpu_custom_call.1} parent=55 // pred_check
          %p855 = pneg %p271
        $region94: #{tpu_custom_call.1} parent=55 // pred_check_branch
          %857 = sbr.rel (%p855) target = $region96
        $region95: #{tpu_custom_call.1} parent=55 // pred_region
          %859 = dma.done [#allocation5], 128
        $region96: #{tpu_custom_call.1} parent=55 // pred_fallthru
          _
      $region56: #{tpu_custom_call.1} parent=5 // pred_fallthru
        _
      %p860 = scmp.le.s32.totalorder 2, %s22
      // Predicated region
      $region97: #{tpu_custom_call.1} parent=5 // pred_check
        %p861 = pneg %p860
      $region98: #{tpu_custom_call.1} parent=5 // pred_check_branch
        %863 = sbr.rel (%p861) target = $region100
      $region99: #{tpu_custom_call.1} parent=5 // pred_region
        %s864 = ssub.s32 %s22, 2
      $region100: #{tpu_custom_call.1} parent=5 // pred_fallthru
        _
    $region6: #{tpu_custom_call.1} parent=1 // loop_footer
      %s26 = sadd.s32 1, %s22
    $region7: #{tpu_custom_call.1} parent=1 // loop_footer_branch
      %21 = sbr.rel target = $region3
    $region8: #{tpu_custom_call.1} parent=1 // loop_exit
      _
    %865 = vsyncpa [#allocation4], 1
    %s866 = scalar_lea.sflag [#allocation4], 1
    %867 = vsyncpa %s866, 1
    %868 = vsyncpa [#allocation7], 1
    %869 = vsyncpa [#allocation10], 1
    %s870 = scalar_lea.sflag [#allocation10], 1
    %871 = vsyncpa %s870, 1
    %872 = vsyncpa [#allocation13], 1
    %873 = vsyncpa [#allocation5], 1
    %s874 = scalar_lea.sflag [#allocation5], 1
    %875 = vsyncpa %s874, 1

</llo_original>
